<compile_context>
chip_gen: v7x
topology: tpu7x:2x2x1
jax: 0.10.0
libtpu: 0.0.40
codegen_flags: <defaults>
</compile_context>

<pallas_src>
import functools

import jax
import jax.numpy as jnp
from jax.experimental import pallas as pl
from jax.experimental.pallas import tpu as pltpu


def _round_up(n, m):
    return ((n + m - 1) // m) * m


def classifier_kernel(x_ref, w1_ref, b1_ref, w2_ref, b2_ref, o_ref, *, matmul_dtype):
    # x:  [TB, latent]      w1: [latent, HPAD]   b1: [1, HPAD]
    # w2: [HPAD, nclass]    b2: [1, nclass]      o:  [TB, nclass]
    x = x_ref[...]
    w1 = w1_ref[...]
    w2 = w2_ref[...]
    if matmul_dtype is not None:
        x = x.astype(matmul_dtype)
        w1 = w1.astype(matmul_dtype)
        w2 = w2.astype(matmul_dtype)

    # Linear 1 (MXU matmul, f32 accumulation) + bias, then ReLU (VPU, f32).
    h = jnp.dot(x, w1, preferred_element_type=jnp.float32) + b1_ref[...]
    h = jnp.maximum(h, 0.0)
    # Dropout(0.2) -> identity at inference.
    if matmul_dtype is not None:
        h = h.astype(matmul_dtype)
    # Linear 2 + bias. Padded hidden rows of w2 are zero, so they contribute nothing.
    out = jnp.dot(h, w2, preferred_element_type=jnp.float32) + b2_ref[...]
    o_ref[...] = out.astype(o_ref.dtype)


def pad_params(w1, b1, w2, b2, dtype=jnp.float32):
    """Pad hidden dim to 128 lanes. Call ONCE at parameter-load time (hoisted out of forward)."""
    latent, hidden = w1.shape
    num_classes = w2.shape[1]
    HPAD = _round_up(hidden, 128)
    w1p = jnp.zeros((latent, HPAD), dtype).at[:, :hidden].set(w1.astype(dtype))
    b1p = jnp.zeros((1, HPAD), dtype).at[:, :hidden].set(b1.reshape(1, hidden).astype(dtype))
    w2p = jnp.zeros((HPAD, num_classes), dtype).at[:hidden, :].set(w2.astype(dtype))
    b2p = b2.reshape(1, num_classes).astype(dtype)
    return w1p, b1p, w2p, b2p


def classifier_forward(x, padded_params, *, block_b=8192, matmul_dtype=None):
    w1p, b1p, w2p, b2p = padded_params
    B, latent = x.shape
    HPAD = w1p.shape[1]
    num_classes = w2p.shape[1]
    dtype = x.dtype

    # Batch tile: large (up to block_b rows, multiple of 8), never larger than needed.
    TB = min(block_b, _round_up(B, 8))
    # v7x megacore: make sure there are >= 2 grid steps when the batch can be split, so
    # dimension_semantics=("parallel",) shards tiles across both TensorCores.
    if pl.cdiv(B, TB) < 2 and B > 8:
        TB = min(TB, _round_up(pl.cdiv(B, 2), 8))
    grid = (pl.cdiv(B, TB),)  # ragged trailing block handled by Pallas masking

    kernel = functools.partial(classifier_kernel, matmul_dtype=matmul_dtype)

    out = pl.pallas_call(
        kernel,
        out_shape=jax.ShapeDtypeStruct((B, num_classes), dtype),
        grid=grid,
        in_specs=[
            pl.BlockSpec((TB, latent), lambda i: (i, 0)),          # x: tiled over batch
            pl.BlockSpec((latent, HPAD), lambda i: (0, 0)),        # w1: VMEM-resident
            pl.BlockSpec((1, HPAD), lambda i: (0, 0)),             # b1: VMEM-resident
            pl.BlockSpec((HPAD, num_classes), lambda i: (0, 0)),   # w2: VMEM-resident
            pl.BlockSpec((1, num_classes), lambda i: (0, 0)),      # b2: VMEM-resident
        ],
        out_specs=pl.BlockSpec((TB, num_classes), lambda i: (i, 0)),
        compiler_params=pltpu.CompilerParams(
            dimension_semantics=("parallel",),
        ),
    )(x, w1p, b1p, w2p, b2p)
    return out


def init_params(key, latent_dim=128, hidden=64, num_classes=10, dtype=jnp.float32):
    """Deterministic init mimicking PyTorch's default Linear init (uniform +-1/sqrt(fan_in))."""
    k1, k2, k3, k4 = jax.random.split(key, 4)
    bound1 = 1.0 / jnp.sqrt(latent_dim)
    bound2 = 1.0 / jnp.sqrt(hidden)
    w1 = jax.random.uniform(k1, (latent_dim, hidden), dtype, -bound1, bound1)
    b1 = jax.random.uniform(k2, (1, hidden), dtype, -bound1, bound1)
    w2 = jax.random.uniform(k3, (hidden, num_classes), dtype, -bound2, bound2)
    b2 = jax.random.uniform(k4, (1, num_classes), dtype, -bound2, bound2)
    return w1, b1, w2, b2


def _reference(x, w1, b1, w2, b2):
    return jnp.maximum(x @ w1 + b1, 0.0) @ w2 + b2


if __name__ == "__main__":
    latent_dim, hidden, num_classes = 128, 64, 10

    key = jax.random.PRNGKey(0)
    kx, kp, kx2 = jax.random.split(key, 3)
    w1, b1, w2, b2 = init_params(kp, latent_dim, hidden, num_classes)
    padded = pad_params(w1, b1, w2, b2)  # hoisted: done once, reused by every forward call

    # Small, PyTorch-module-consistent example input: [batch=8, latent_dim=128].
    x = jax.random.normal(kx, (8, latent_dim), dtype=jnp.float32)
    out = jax.block_until_ready(classifier_forward(x, padded))
    ref = _reference(x, w1, b1, w2, b2)
    assert out.shape == (8, num_classes)
    assert jnp.allclose(out, ref, atol=1e-5, rtol=1e-5)

    # Ragged-batch path (B not a multiple of the tile / of 8) + multi-step grid (v7x split).
    x2 = jax.random.normal(kx2, (50, latent_dim), dtype=jnp.float32)
    out2 = jax.block_until_ready(classifier_forward(x2, padded))
    ref2 = _reference(x2, w1, b1, w2, b2)
    assert out2.shape == (50, num_classes)
    assert jnp.allclose(out2, ref2, atol=1e-5, rtol=1e-5)

    # bf16-MXU path (v5e de-bottleneck): f32 accumulation, looser logits tolerance.
    out3 = jax.block_until_ready(
        classifier_forward(x2, padded, matmul_dtype=jnp.bfloat16))
    assert out3.shape == (50, num_classes)
    assert jnp.allclose(out3, ref2, atol=2e-2, rtol=2e-2)

    print("KERNEL_OK")
</pallas_src>

<mosaic_0001>
module attributes {stable_mosaic.version = 11 : i64} {
  func.func @classifier_kernel(%arg0: i32, %arg1: memref<8x128xf32, #tpu.memory_space<vmem>>, %arg2: memref<128x128xf32, #tpu.memory_space<vmem>>, %arg3: memref<1x128xf32, #tpu.memory_space<vmem>>, %arg4: memref<128x10xf32, #tpu.memory_space<vmem>>, %arg5: memref<1x10xf32, #tpu.memory_space<vmem>>, %arg6: memref<8x10xf32, #tpu.memory_space<vmem>>) attributes {dimension_semantics = [#tpu.dimension_semantics<parallel>], iteration_bounds = array<i64: 1>, scalar_prefetch = 0 : i64, scratch_operands = 0 : i64, tpu.core_type = #tpu.core_type<tc>, window_params = [{transform_indices = @transform_0, window_bounds = array<i64: 8, 128>}, {pipeline_mode = #tpu.pipeline_mode<synchronous>, transform_indices = @transform_1, window_bounds = array<i64: 128, 128>}, {pipeline_mode = #tpu.pipeline_mode<synchronous>, transform_indices = @transform_2, window_bounds = array<i64: 1, 128>}, {pipeline_mode = #tpu.pipeline_mode<synchronous>, transform_indices = @transform_3, window_bounds = array<i64: 128, 10>}, {pipeline_mode = #tpu.pipeline_mode<synchronous>, transform_indices = @transform_4, window_bounds = array<i64: 1, 10>}, {transform_indices = @transform_5, window_bounds = array<i64: 8, 10>}]} {
    %c0 = arith.constant 0 : index
    %c0_0 = arith.constant 0 : index
    %0 = vector.load %arg1[%c0, %c0_0] : memref<8x128xf32, #tpu.memory_space<vmem>>, vector<8x128xf32>
    %c0_1 = arith.constant 0 : index
    %c0_2 = arith.constant 0 : index
    %1 = vector.load %arg2[%c0_1, %c0_2] : memref<128x128xf32, #tpu.memory_space<vmem>>, vector<128x128xf32>
    %c0_3 = arith.constant 0 : index
    %c0_4 = arith.constant 0 : index
    %2 = vector.load %arg4[%c0_3, %c0_4] : memref<128x10xf32, #tpu.memory_space<vmem>>, vector<128x10xf32>
    %cst = arith.constant dense<0.000000e+00> : vector<8x128xf32>
    %3 = tpu.matmul %0, %1, %cst {dimension_numbers = #tpu.dot_dimension_numbers<[1], [0], [0], [1], [0, 0, 1, 1], [], []>} : vector<8x128xf32>, vector<128x128xf32>, vector<8x128xf32> -> vector<8x128xf32>
    %c0_5 = arith.constant 0 : index
    %c0_6 = arith.constant 0 : index
    %4 = vector.load %arg3[%c0_5, %c0_6] : memref<1x128xf32, #tpu.memory_space<vmem>>, vector<1x128xf32>
    %5 = vector.broadcast %4 : vector<1x128xf32> to vector<8x128xf32>
    %6 = arith.addf %3, %5 : vector<8x128xf32>
    %cst_7 = arith.constant 0.000000e+00 : f32
    %7 = vector.broadcast %cst_7 : f32 to vector<8x128xf32>
    %8 = arith.maximumf %6, %7 : vector<8x128xf32>
    %cst_8 = arith.constant dense<0.000000e+00> : vector<8x10xf32>
    %9 = tpu.matmul %8, %2, %cst_8 {dimension_numbers = #tpu.dot_dimension_numbers<[1], [0], [0], [1], [0, 0, 1, 1], [], []>} : vector<8x128xf32>, vector<128x10xf32>, vector<8x10xf32> -> vector<8x10xf32>
    %c0_9 = arith.constant 0 : index
    %c0_10 = arith.constant 0 : index
    %10 = vector.load %arg5[%c0_9, %c0_10] : memref<1x10xf32, #tpu.memory_space<vmem>>, vector<1x10xf32>
    %11 = vector.broadcast %10 : vector<1x10xf32> to vector<8x10xf32>
    %12 = arith.addf %9, %11 : vector<8x10xf32>
    %c0_11 = arith.constant 0 : index
    %c0_12 = arith.constant 0 : index
    %13 = vector.load %arg6[%c0_11, %c0_12] : memref<8x10xf32, #tpu.memory_space<vmem>>, vector<8x10xf32>
    tpu.vector_store %arg6[%c0_11, %c0_12], %12 {strides = array<i32>} : memref<8x10xf32, #tpu.memory_space<vmem>>, vector<8x10xf32>,
    return
  }
  func.func @transform_0(%arg0: i32) -> (i32, i32) {
    %c0_i32 = arith.constant 0 : i32
    %c0_i32_0 = arith.constant 0 : i32
    return %arg0, %c0_i32 : i32, i32
  }
  func.func @transform_1(%arg0: i32) -> (i32, i32) {
    %c0_i32 = arith.constant 0 : i32
    %c0_i32_0 = arith.constant 0 : i32
    %c0_i32_1 = arith.constant 0 : i32
    return %c0_i32, %c0_i32_0 : i32, i32
  }
  func.func @transform_2(%arg0: i32) -> (i32, i32) {
    %c0_i32 = arith.constant 0 : i32
    %c0_i32_0 = arith.constant 0 : i32
    %c0_i32_1 = arith.constant 0 : i32
    return %c0_i32, %c0_i32_0 : i32, i32
  }
  func.func @transform_3(%arg0: i32) -> (i32, i32) {
    %c0_i32 = arith.constant 0 : i32
    %c0_i32_0 = arith.constant 0 : i32
    %c0_i32_1 = arith.constant 0 : i32
    return %c0_i32, %c0_i32_0 : i32, i32
  }
  func.func @transform_4(%arg0: i32) -> (i32, i32) {
    %c0_i32 = arith.constant 0 : i32
    %c0_i32_0 = arith.constant 0 : i32
    %c0_i32_1 = arith.constant 0 : i32
    return %c0_i32, %c0_i32_0 : i32, i32
  }
  func.func @transform_5(%arg0: i32) -> (i32, i32) {
    %c0_i32 = arith.constant 0 : i32
    %c0_i32_0 = arith.constant 0 : i32
    return %arg0, %c0_i32 : i32, i32
  }
}

</mosaic_0001>

<llo_original>
// kernel: tpu_custom_call.1
$region0: #{tpu_custom_call.1}
  #allocation0 [shape = 'u32[]', space=smem, size = 0x4, offset = 0x4, fixed_abs, tag = 'smem constant byte address 0x4 - core index']
  #allocation1 [shape = 'u32[144,128]{1,0:T(1,128)}', space=vmem, size = 0x12000, scoped, tag = 'internal scratch']
  %s0 = inlined_call_operand.vmem [shape: f32[8,128], index: 0, kind: input, shape index: {}]
  %s1 = inlined_call_operand.vmem [shape: f32[128,128], index: 1, kind: input, shape index: {}]
  %s2 = inlined_call_operand.vmem [shape: f32[1,128], index: 2, kind: input, shape index: {}]
  %s3 = inlined_call_operand.vmem [shape: f32[128,10], index: 3, kind: input, shape index: {}]
  %s4 = inlined_call_operand.vmem [shape: f32[1,10], index: 4, kind: input, shape index: {}]
  %s5 = inlined_call_operand.hbm [shape: f32[8,10], index: 5, kind: output, shape index: {}]
  %s6 = sld [smem:[#allocation0]]
  $region30: #{tpu_custom_call.1} parent=0
    _
  %s8 = ssub.s32 1, %s6
  %s9 = scalar_select 0, %s8, %s6
  $region1: #{tpu_custom_call.1} parent=0
    #allocation2 [shape = 'u8[4096]{0}', space=vmem, size = 0x1000, scoped, tag = 'output window, operand 0, single buffered']
    #allocation3 [shape = 's32[1]{0}', space=sflag, size = 0x4, scoped, tag = 'scoped memory for tpu_custom_call.1']
    %10 = vsyncpa [#allocation3], 0
    // Predicated region
    $region2: #{tpu_custom_call.1} parent=1 // pred_check
      _
    $region3: #{tpu_custom_call.1} parent=1 // pred_check_branch
      %12 = sbr.rel (0) target = $region5
    $region4: #{tpu_custom_call.1} parent=1 // pred_region
      _
    $region5: #{tpu_custom_call.1} parent=1 // pred_fallthru
      _
    // Predicated region
    $region6: #{tpu_custom_call.1} parent=1 // pred_check
      _
    $region7: #{tpu_custom_call.1} parent=1 // pred_check_branch
      %14 = sbr.rel (0) target = $region9
    $region8: #{tpu_custom_call.1} parent=1 // pred_region
      _
    $region9: #{tpu_custom_call.1} parent=1 // pred_fallthru
      _
    // Predicated region
    $region10: #{tpu_custom_call.1} parent=1 // pred_check
      _
    $region11: #{tpu_custom_call.1} parent=1 // pred_check_branch
      %16 = sbr.rel (0) target = $region13
    $region12: #{tpu_custom_call.1} parent=1 // pred_region
      _
    $region13: #{tpu_custom_call.1} parent=1 // pred_fallthru
      _
    // Predicated region
    $region14: #{tpu_custom_call.1} parent=1 // pred_check
      _
    $region15: #{tpu_custom_call.1} parent=1 // pred_check_branch
      %18 = sbr.rel (0) target = $region17
    $region16: #{tpu_custom_call.1} parent=1 // pred_region
      _
    $region17: #{tpu_custom_call.1} parent=1 // pred_fallthru
      _
    // Predicated region
    $region18: #{tpu_custom_call.1} parent=1 // pred_check
      _
    $region19: #{tpu_custom_call.1} parent=1 // pred_check_branch
      %20 = sbr.rel (0) target = $region21
    $region20: #{tpu_custom_call.1} parent=1 // pred_region
      _
    $region21: #{tpu_custom_call.1} parent=1 // pred_fallthru
      _
    %v21 = vld [vmem:[%s0] sm:$0xff]
    %v22 = vld [vmem:[%s1] sm:$0xff]
    %v23 = vld [vmem:[%s1 + $0x8] sm:$0xff]
    %v24 = vld [vmem:[%s1 + $0x10] sm:$0xff]
    %v25 = vld [vmem:[%s1 + $0x18] sm:$0xff]
    %v26 = vld [vmem:[%s1 + $0x20] sm:$0xff]
    %v27 = vld [vmem:[%s1 + $0x28] sm:$0xff]
    %v28 = vld [vmem:[%s1 + $0x30] sm:$0xff]
    %v29 = vld [vmem:[%s1 + $0x38] sm:$0xff]
    %v30 = vld [vmem:[%s1 + $0x40] sm:$0xff]
    %v31 = vld [vmem:[%s1 + $0x48] sm:$0xff]
    %v32 = vld [vmem:[%s1 + $0x50] sm:$0xff]
    %v33 = vld [vmem:[%s1 + $0x58] sm:$0xff]
    %v34 = vld [vmem:[%s1 + $0x60] sm:$0xff]
    %v35 = vld [vmem:[%s1 + $0x68] sm:$0xff]
    %v36 = vld [vmem:[%s1 + $0x70] sm:$0xff]
    %v37 = vld [vmem:[%s1 + $0x78] sm:$0xff]
    %v38 = vld [vmem:[%s3] sm:$0xff]
    %v39 = vld [vmem:[%s3 + $0x8] sm:$0xff]
    %v40 = vld [vmem:[%s3 + $0x10] sm:$0xff]
    %v41 = vld [vmem:[%s3 + $0x18] sm:$0xff]
    %v42 = vld [vmem:[%s3 + $0x20] sm:$0xff]
    %v43 = vld [vmem:[%s3 + $0x28] sm:$0xff]
    %v44 = vld [vmem:[%s3 + $0x30] sm:$0xff]
    %v45 = vld [vmem:[%s3 + $0x38] sm:$0xff]
    %v46 = vld [vmem:[%s3 + $0x40] sm:$0xff]
    %v47 = vld [vmem:[%s3 + $0x48] sm:$0xff]
    %v48 = vld [vmem:[%s3 + $0x50] sm:$0xff]
    %v49 = vld [vmem:[%s3 + $0x58] sm:$0xff]
    %v50 = vld [vmem:[%s3 + $0x60] sm:$0xff]
    %v51 = vld [vmem:[%s3 + $0x68] sm:$0xff]
    %v52 = vld [vmem:[%s3 + $0x70] sm:$0xff]
    %v53 = vld [vmem:[%s3 + $0x78] sm:$0xff]
    %v54 = vld [vmem:[%s2] sm:$0x1]
    %v56 = vlaneseq
    %v57 = vshrl.u32 %v56, 7
    %v58 = vsub.s32 0, %v57
    %v59 = vrot.slane %v54, %v58
    %61 = vmatprep.subr.mxu0 0.0
    %62 = vmatpush1.msra.mxu0 %v22
    %63 = vmatprep.subr.mxu0 0.0
    %64 = vmatpush1.msra.mxu0 %v23
    %65 = vmatprep.subr.mxu0 0.0
    %66 = vmatpush1.msra.mxu0 %v24
    %67 = vmatprep.subr.mxu0 0.0
    %68 = vmatpush1.msra.mxu0 %v25
    %69 = vmatprep.subr.mxu0 0.0
    %70 = vmatpush1.msra.mxu0 %v26
    %71 = vmatprep.subr.mxu0 0.0
    %72 = vmatpush1.msra.mxu0 %v27
    %73 = vmatprep.subr.mxu0 0.0
    %74 = vmatpush1.msra.mxu0 %v28
    %75 = vmatprep.subr.mxu0 0.0
    %76 = vmatpush1.msra.mxu0 %v29
    %77 = vmatprep.subr.mxu0 0.0
    %78 = vmatpush1.msra.mxu0 %v30
    %79 = vmatprep.subr.mxu0 0.0
    %80 = vmatpush1.msra.mxu0 %v31
    %81 = vmatprep.subr.mxu0 0.0
    %82 = vmatpush1.msra.mxu0 %v32
    %83 = vmatprep.subr.mxu0 0.0
    %84 = vmatpush1.msra.mxu0 %v33
    %85 = vmatprep.subr.mxu0 0.0
    %86 = vmatpush1.msra.mxu0 %v34
    %87 = vmatprep.subr.mxu0 0.0
    %88 = vmatpush1.msra.mxu0 %v35
    %89 = vmatprep.subr.mxu0 0.0
    %90 = vmatpush1.msra.mxu0 %v36
    %91 = vmatprep.subr.mxu0 0.0
    %92 = vmatpush1.msra.mxu0 %v37
    %93 = vmatprep.subr.mxu0 0.0
    %94 = vmatpush1.msra.mxu0 0.0
    %95 = vmatprep.subr.mxu0 0.0
    %96 = vmatpush1.msra.mxu0 0.0
    %97 = vmatprep.subr.mxu0 0.0
    %98 = vmatpush1.msra.mxu0 0.0
    %99 = vmatprep.subr.mxu0 0.0
    %100 = vmatpush1.msra.mxu0 0.0
    %101 = vmatprep.subr.mxu0 0.0
    %102 = vmatpush1.msra.mxu0 0.0
    %103 = vmatprep.subr.mxu0 0.0
    %104 = vmatpush1.msra.mxu0 0.0
    %105 = vmatprep.subr.mxu0 0.0
    %106 = vmatpush1.msra.mxu0 0.0
    %107 = vmatprep.subr.mxu0 0.0
    %108 = vmatpush1.msra.mxu0 0.0
    %109 = vmatprep.subr.mxu0 0.0
    %110 = vmatpush1.msra.mxu0 0.0
    %111 = vmatprep.subr.mxu0 0.0
    %112 = vmatpush1.msra.mxu0 0.0
    %113 = vmatprep.subr.mxu0 0.0
    %114 = vmatpush1.msra.mxu0 0.0
    %115 = vmatprep.subr.mxu0 0.0
    %116 = vmatpush1.msra.mxu0 0.0
    %117 = vmatprep.subr.mxu0 0.0
    %118 = vmatpush1.msra.mxu0 0.0
    %119 = vmatprep.subr.mxu0 0.0
    %120 = vmatpush1.msra.mxu0 0.0
    %121 = vmatprep.subr.mxu0 0.0
    %122 = vmatpush1.msra.mxu0 0.0
    %123 = vmatprep.subr.mxu0 0.0
    %124 = vmatpush1.msra.mxu0 0.0
    %125 = vmatprep.mubr.f32.mxu0 0.0
    %126 = vmatmul.mubr.f32.gmra.mrb[0].mxu0 %v21
    %v127 = vpop.f32.mrb[0].mxu0
    %v128 = vadd.f32 %v59, %v127
    %v129 = vpop.f32.mrb[0].mxu0
    %130 = vdwg.mxu0
    %v131 = vmax.f32 %v128, 0.0
    %v132 = vld [vmem:[%s4] sm:$0x1]
    %v134 = vlaneseq
    %v135 = vshrl.u32 %v134, 7
    %v136 = vsub.s32 0, %v135
    %v137 = vrot.slane %v132, %v136
    %139 = vmatprep.subr.mxu0 0.0
    %140 = vmatpush1.msra.mxu0 %v38
    %141 = vmatprep.subr.mxu0 0.0
    %142 = vmatpush1.msra.mxu0 %v39
    %143 = vmatprep.subr.mxu0 0.0
    %144 = vmatpush1.msra.mxu0 %v40
    %145 = vmatprep.subr.mxu0 0.0
    %146 = vmatpush1.msra.mxu0 %v41
    %147 = vmatprep.subr.mxu0 0.0
    %148 = vmatpush1.msra.mxu0 %v42
    %149 = vmatprep.subr.mxu0 0.0
    %150 = vmatpush1.msra.mxu0 %v43
    %151 = vmatprep.subr.mxu0 0.0
    %152 = vmatpush1.msra.mxu0 %v44
    %153 = vmatprep.subr.mxu0 0.0
    %154 = vmatpush1.msra.mxu0 %v45
    %155 = vmatprep.subr.mxu0 0.0
    %156 = vmatpush1.msra.mxu0 %v46
    %157 = vmatprep.subr.mxu0 0.0
    %158 = vmatpush1.msra.mxu0 %v47
    %159 = vmatprep.subr.mxu0 0.0
    %160 = vmatpush1.msra.mxu0 %v48
    %161 = vmatprep.subr.mxu0 0.0
    %162 = vmatpush1.msra.mxu0 %v49
    %163 = vmatprep.subr.mxu0 0.0
    %164 = vmatpush1.msra.mxu0 %v50
    %165 = vmatprep.subr.mxu0 0.0
    %166 = vmatpush1.msra.mxu0 %v51
    %167 = vmatprep.subr.mxu0 0.0
    %168 = vmatpush1.msra.mxu0 %v52
    %169 = vmatprep.subr.mxu0 0.0
    %170 = vmatpush1.msra.mxu0 %v53
    %171 = vmatprep.subr.mxu0 0.0
    %172 = vmatpush1.msra.mxu0 0.0
    %173 = vmatprep.subr.mxu0 0.0
    %174 = vmatpush1.msra.mxu0 0.0
    %175 = vmatprep.subr.mxu0 0.0
    %176 = vmatpush1.msra.mxu0 0.0
    %177 = vmatprep.subr.mxu0 0.0
    %178 = vmatpush1.msra.mxu0 0.0
    %179 = vmatprep.subr.mxu0 0.0
    %180 = vmatpush1.msra.mxu0 0.0
    %181 = vmatprep.subr.mxu0 0.0
    %182 = vmatpush1.msra.mxu0 0.0
    %183 = vmatprep.subr.mxu0 0.0
    %184 = vmatpush1.msra.mxu0 0.0
    %185 = vmatprep.subr.mxu0 0.0
    %186 = vmatpush1.msra.mxu0 0.0
    %187 = vmatprep.subr.mxu0 0.0
    %188 = vmatpush1.msra.mxu0 0.0
    %189 = vmatprep.subr.mxu0 0.0
    %190 = vmatpush1.msra.mxu0 0.0
    %191 = vmatprep.subr.mxu0 0.0
    %192 = vmatpush1.msra.mxu0 0.0
    %193 = vmatprep.subr.mxu0 0.0
    %194 = vmatpush1.msra.mxu0 0.0
    %195 = vmatprep.subr.mxu0 0.0
    %196 = vmatpush1.msra.mxu0 0.0
    %197 = vmatprep.subr.mxu0 0.0
    %198 = vmatpush1.msra.mxu0 0.0
    %199 = vmatprep.subr.mxu0 0.0
    %200 = vmatpush1.msra.mxu0 0.0
    %201 = vmatprep.subr.mxu0 0.0
    %202 = vmatpush1.msra.mxu0 0.0
    %203 = vmatprep.mubr.f32.mxu0 0.0
    %204 = vmatmul.mubr.f32.gmra.mrb[0].mxu0 %v131
    %v205 = vpop.f32.mrb[0].mxu0
    %v206 = vadd.f32 %v137, %v205
    %v207 = vpop.f32.mrb[0].mxu0
    %208 = vdwg.mxu0
    %vm209 = vcmask 80896
    %210 = vst.msk [vmem:[#allocation2] sm:$0xff] %vm209, %v206
    // Predicated region
    $region22: #{tpu_custom_call.1} parent=1 // pred_check
      _
    $region23: #{tpu_custom_call.1} parent=1 // pred_check_branch
      %212 = sbr.rel (0) target = $region25
    $region24: #{tpu_custom_call.1} parent=1 // pred_region
      %s214 = ssub.s32 128, 128
      %215 = vsyncadd [#allocation3], %s214
      %s217 = sshll.u32 [#allocation2], 4
      %s218 = int_to_ptr.vmem [resolvable:$true] %s217
      %220 = dma.vmem_to_hbm [thread:$0]  %s218, 128, %s5, [#allocation3]
    $region25: #{tpu_custom_call.1} parent=1 // pred_fallthru
      _
    // Predicated region
    $region26: #{tpu_custom_call.1} parent=1 // pred_check
      _
    $region27: #{tpu_custom_call.1} parent=1 // pred_check_branch
      %222 = sbr.rel (0) target = $region29
    $region28: #{tpu_custom_call.1} parent=1 // pred_region
      %223 = dma.done [#allocation3], 128
    $region29: #{tpu_custom_call.1} parent=1 // pred_fallthru
      _
    %224 = vsyncpa [#allocation3], 1

</llo_original>
